<compile_context>
chip_gen: v5e
topology: v5e:2x2
jax: 0.10.0
libtpu: 0.0.40
codegen_flags: <defaults>
</compile_context>

<pallas_src>
from functools import partial

import jax
import jax.numpy as jnp
from jax import lax
from jax.experimental import pallas as pl
from jax.experimental.pallas import tpu as pltpu


def selayer_kernel(x1_ref, x2_ref, wbd1_ref, wbd2_ref, br_ref,
                   w1bd_ref, w2bd_ref, out_ref, *, inv_hw):
    """One batch block per grid step, fully block-wide (no per-sample loop).

    x1_ref / x2_ref / out_ref : (RB, HW)   RB = batch_block*C rows, HW lanes
    wbd1_ref / wbd2_ref       : (RB, RB)   block-diagonal 1x1-conv weight halves
    br_ref                    : (RB, 1)    tiled conv bias (one value per row)
    w1bd_ref                  : (Bn*HID, RB)  block-diagonal fc[0] weight
    w2bd_ref                  : (RB, Bn*HID)  block-diagonal fc[2] weight
    """
    a = x1_ref[...].astype(jnp.float32)
    b = x2_ref[...].astype(jnp.float32)

    # channel_reduction (1x1 conv on cat([x1, x2], C)) for the WHOLE batch
    # block: two MXU matmuls with block-diagonal weights (equivalent to
    # W[:, :C] @ x1[n] + W[:, C:] @ x2[n] for every n in the block), plus a
    # single hoisted bias broadcast.
    x = (jnp.dot(wbd1_ref[...], a, preferred_element_type=jnp.float32)
         + jnp.dot(wbd2_ref[...], b, preferred_element_type=jnp.float32)
         + br_ref[...])                                        # (RB, HW)

    # Global average pool over the true spatial extent: one dense cross-lane
    # reduce over the full slab (not per sample).
    y = jnp.sum(x, axis=1, keepdims=True) * inv_hw             # (RB, 1)

    # SE bottleneck, batched over the block via block-diagonal weights.
    # Broadcast the pooled column across a full 128-lane group so both dots
    # have a standard (K, 128) RHS instead of a degenerate N=1 matmul.
    y_w = jnp.broadcast_to(y, (y.shape[0], 128))               # (RB, 128)
    h = jnp.maximum(
        jnp.dot(w1bd_ref[...], y_w, preferred_element_type=jnp.float32), 0.0)
    s = jnp.maximum(
        jnp.dot(w2bd_ref[...], h, preferred_element_type=jnp.float32), 0.0)
    scale = s[:, 0:1]                                          # (RB, 1)

    # Block-wide epilogue: one dense multiply, one lane- and sublane-full store.
    out_ref[...] = (x * scale).astype(out_ref.dtype)


def _block_diag(w, reps):
    """(m, k) -> (reps*m, reps*k) block-diagonal tiling (wrapper side, tiny)."""
    m, k = w.shape
    eye = jnp.eye(reps, dtype=w.dtype)
    return jnp.einsum('rs,mk->rmsk', eye, w).reshape(reps * m, reps * k)


def _est_vmem_bytes(bn, C, HW, HID, itemsize):
    rb = bn * C
    io_blocks = 2 * 3 * rb * HW * itemsize          # x1,x2,out double-buffered
    weights = 2 * 4 * (2 * rb * rb + 2 * rb * bn * HID + rb)
    temps = 3 * rb * HW * 4                         # in-kernel f32 slabs
    return io_blocks + weights + temps


def _pick_batch_block(N, C, HW, HID, itemsize, vmem_budget_bytes):
    def aligned(bn):                                # sublane-aligned row block
        return (bn * C) % 8 == 0 or bn == N
    divs = [d for d in range(1, N + 1) if N % d == 0]
    ok = [d for d in divs
          if aligned(d) and _est_vmem_bytes(d, C, HW, HID, itemsize) <= vmem_budget_bytes]
    if not ok:
        ok = [d for d in divs if aligned(d)] or [N]
        return min(ok)
    # Prefer the largest block that still leaves >=2 grid steps (v7x megacore).
    multi = [d for d in ok if N // d >= 2]
    return max(multi) if multi else max(ok)


def selayer_pallas(x1, x2, params, *, batch_block=None, vmem_budget_bytes=12 << 20):
    """x1, x2: (N, C, H, W).  params = (wr, br, w1, w2) in PyTorch layouts:
    wr (C, 2C), br (C,), w1 (HID, C), w2 (C, HID)."""
    wr, br, w1, w2 = params
    N, C, H, W = x1.shape
    HID = w1.shape[0]
    assert x2.shape == (N, C, H, W), "x1/x2 must share (N, C, H, W)"
    assert wr.shape == (C, 2 * C) and br.shape == (C,)
    assert w1.shape == (HID, C) and w2.shape == (C, HID)
    HW = H * W
    # TODO(synk): pad HW up to a multiple of 128 (while dividing the pool by the
    # true H*W) to keep stores lane-dense for spatial sizes like 14x14.
    assert HW % 128 == 0, "H*W must be a multiple of 128 for lane-dense tiles"

    dt = x1.dtype
    itemsize = jnp.dtype(dt).itemsize
    if batch_block is None:
        batch_block = _pick_batch_block(N, C, HW, HID, itemsize, vmem_budget_bytes)
    Bn = batch_block
    assert N % Bn == 0, "batch_block must divide N"
    assert (Bn * C) % 8 == 0 or Bn == N, "row block must be sublane-aligned"
    RB = Bn * C
    grid = (N // Bn,)

    # Wrapper-side layout / weight plumbing (tiny, done once, outside the kernel).
    x1f = x1.reshape(N * C, HW)                 # pure view of NCHW, no copy
    x2f = x2.reshape(N * C, HW)
    f32 = jnp.float32
    wbd1 = _block_diag(wr[:, :C].astype(f32), Bn)       # (RB, RB)  x1 half of cat
    wbd2 = _block_diag(wr[:, C:].astype(f32), Bn)       # (RB, RB)  x2 half of cat
    w1bd = _block_diag(w1.astype(f32), Bn)              # (Bn*HID, RB)
    w2bd = _block_diag(w2.astype(f32), Bn)              # (RB, Bn*HID)
    brt = jnp.tile(br.astype(f32), Bn).reshape(RB, 1)   # (RB, 1)

    # Explicit VMEM limit derived from the block footprint (capped well under
    # v7x's 64 MiB physical; above v5e's 16 MiB scoped default when needed).
    est = _est_vmem_bytes(Bn, C, HW, HID, itemsize)
    vmem_limit = int(min(32 << 20, max(8 << 20, 2 * est)))

    grid_spec = pltpu.PrefetchScalarGridSpec(
        num_scalar_prefetch=0,
        grid=grid,
        in_specs=[
            pl.BlockSpec((RB, HW), lambda i: (i, 0)),          # x1 rows
            pl.BlockSpec((RB, HW), lambda i: (i, 0)),          # x2 rows
            pl.BlockSpec((RB, RB), lambda i: (0, 0)),          # conv W, x1 half
            pl.BlockSpec((RB, RB), lambda i: (0, 0)),          # conv W, x2 half
            pl.BlockSpec((RB, 1), lambda i: (0, 0)),           # conv bias
            pl.BlockSpec((Bn * HID, RB), lambda i: (0, 0)),    # fc[0] weight
            pl.BlockSpec((RB, Bn * HID), lambda i: (0, 0)),    # fc[2] weight
        ],
        out_specs=pl.BlockSpec((RB, HW), lambda i: (i, 0)),
    )

    out = pl.pallas_call(
        partial(selayer_kernel, inv_hw=1.0 / HW),
        out_shape=jax.ShapeDtypeStruct((N * C, HW), dt),
        grid_spec=grid_spec,
        compiler_params=pltpu.CompilerParams(
            dimension_semantics=("parallel",),
            vmem_limit_bytes=vmem_limit),
    )(x1f, x2f, wbd1, wbd2, brt, w1bd, w2bd)

    return out.reshape(N, C, H, W)


def selayer_ref(x1, x2, params):
    """Pure-JAX NCHW reference mirroring the PyTorch forward exactly."""
    wr, br, w1, w2 = params
    x = jnp.concatenate([x1, x2], axis=1)                          # (N, 2C, H, W)
    x = jnp.einsum('oi,nihw->nohw', wr, x,
                   precision=lax.Precision.HIGHEST) + br[None, :, None, None]
    y = jnp.mean(x, axis=(2, 3))                                   # (N, C)
    y = jax.nn.relu(jnp.einsum('nc,kc->nk', y, w1,
                               precision=lax.Precision.HIGHEST))   # (N, HID)
    y = jax.nn.relu(jnp.einsum('nk,ck->nc', y, w2,
                               precision=lax.Precision.HIGHEST))   # (N, C)
    return x * y[:, :, None, None]


if __name__ == "__main__":
    # Small shapes consistent with the module: batch=4, ioc=4, spatial 16x16.
    # (batch=4 exercises the >=2-grid-step path recommended for v7x megacore.)
    N, C, H, W = 4, 4, 16, 16
    HID = 16                                 # hard-coded in SELayer's fc

    key = jax.random.PRNGKey(0)
    ks = jax.random.split(key, 6)
    x1 = jax.random.normal(ks[0], (N, C, H, W), jnp.float32)
    x2 = jax.random.normal(ks[1], (N, C, H, W), jnp.float32)

    params = (
        0.2 * jax.random.normal(ks[2], (C, 2 * C), jnp.float32),   # channel_reduction weight
        0.2 * jax.random.normal(ks[3], (C,), jnp.float32),         # channel_reduction bias
        0.2 * jax.random.normal(ks[4], (HID, C), jnp.float32),     # fc[0] Linear(C, 16) weight
        0.2 * jax.random.normal(ks[5], (C, HID), jnp.float32),     # fc[2] Linear(16, C) weight
    )

    out = jax.block_until_ready(selayer_pallas(x1, x2, params))
    ref = jax.block_until_ready(selayer_ref(x1, x2, params))

    err = float(jnp.max(jnp.abs(out - ref)))
    assert out.shape == (N, C, H, W)
    assert err < 1e-2, f"mismatch vs reference: max abs err {err}"
    print("KERNEL_OK")
</pallas_src>

<mosaic_0001>
module attributes {stable_mosaic.version = 11 : i64} {
  func.func @selayer_kernel(%arg0: i32, %arg1: memref<8x256xf32, #tpu.memory_space<vmem>>, %arg2: memref<8x256xf32, #tpu.memory_space<vmem>>, %arg3: memref<8x8xf32, #tpu.memory_space<vmem>>, %arg4: memref<8x8xf32, #tpu.memory_space<vmem>>, %arg5: memref<8x1xf32, #tpu.memory_space<vmem>>, %arg6: memref<32x8xf32, #tpu.memory_space<vmem>>, %arg7: memref<8x32xf32, #tpu.memory_space<vmem>>, %arg8: memref<8x256xf32, #tpu.memory_space<vmem>>) attributes {dimension_semantics = [#tpu.dimension_semantics<parallel>], iteration_bounds = array<i64: 2>, scalar_prefetch = 0 : i64, scratch_operands = 0 : i64, tpu.core_type = #tpu.core_type<tc>, window_params = [{transform_indices = @transform_0, window_bounds = array<i64: 8, 256>}, {transform_indices = @transform_1, window_bounds = array<i64: 8, 256>}, {pipeline_mode = #tpu.pipeline_mode<synchronous>, transform_indices = @transform_2, window_bounds = array<i64: 8, 8>}, {pipeline_mode = #tpu.pipeline_mode<synchronous>, transform_indices = @transform_3, window_bounds = array<i64: 8, 8>}, {pipeline_mode = #tpu.pipeline_mode<synchronous>, transform_indices = @transform_4, window_bounds = array<i64: 8, 1>}, {pipeline_mode = #tpu.pipeline_mode<synchronous>, transform_indices = @transform_5, window_bounds = array<i64: 32, 8>}, {pipeline_mode = #tpu.pipeline_mode<synchronous>, transform_indices = @transform_6, window_bounds = array<i64: 8, 32>}, {transform_indices = @transform_7, window_bounds = array<i64: 8, 256>}]} {
    %c0 = arith.constant 0 : index
    %c0_0 = arith.constant 0 : index
    %0 = vector.load %arg1[%c0, %c0_0] : memref<8x256xf32, #tpu.memory_space<vmem>>, vector<8x256xf32>
    %c0_1 = arith.constant 0 : index
    %c0_2 = arith.constant 0 : index
    %1 = vector.load %arg2[%c0_1, %c0_2] : memref<8x256xf32, #tpu.memory_space<vmem>>, vector<8x256xf32>
    %c0_3 = arith.constant 0 : index
    %c0_4 = arith.constant 0 : index
    %2 = vector.load %arg3[%c0_3, %c0_4] : memref<8x8xf32, #tpu.memory_space<vmem>>, vector<8x8xf32>
    %cst = arith.constant dense<0.000000e+00> : vector<8x256xf32>
    %3 = tpu.matmul %2, %0, %cst {dimension_numbers = #tpu.dot_dimension_numbers<[1], [0], [0], [1], [0, 0, 1, 1], [], []>} : vector<8x8xf32>, vector<8x256xf32>, vector<8x256xf32> -> vector<8x256xf32>
    %c0_5 = arith.constant 0 : index
    %c0_6 = arith.constant 0 : index
    %4 = vector.load %arg4[%c0_5, %c0_6] : memref<8x8xf32, #tpu.memory_space<vmem>>, vector<8x8xf32>
    %cst_7 = arith.constant dense<0.000000e+00> : vector<8x256xf32>
    %5 = tpu.matmul %4, %1, %cst_7 {dimension_numbers = #tpu.dot_dimension_numbers<[1], [0], [0], [1], [0, 0, 1, 1], [], []>} : vector<8x8xf32>, vector<8x256xf32>, vector<8x256xf32> -> vector<8x256xf32>
    %6 = arith.addf %3, %5 : vector<8x256xf32>
    %c0_8 = arith.constant 0 : index
    %c0_9 = arith.constant 0 : index
    %7 = vector.load %arg5[%c0_8, %c0_9] : memref<8x1xf32, #tpu.memory_space<vmem>>, vector<8x1xf32>
    %8 = vector.broadcast %7 : vector<8x1xf32> to vector<8x256xf32>
    %9 = arith.addf %6, %8 : vector<8x256xf32>
    %cst_10 = arith.constant dense<0.000000e+00> : vector<8xf32>
    %10 = vector.multi_reduction <add>, %9, %cst_10 [1] : vector<8x256xf32> to vector<8xf32>
    %11 = vector.shape_cast %10 : vector<8xf32> to vector<8x1xf32>
    %cst_11 = arith.constant 3.906250e-03 : f32
    %12 = vector.broadcast %cst_11 : f32 to vector<8x1xf32>
    %13 = arith.mulf %11, %12 : vector<8x1xf32>
    %14 = vector.shape_cast %13 : vector<8x1xf32> to vector<8x1xf32>
    %15 = vector.broadcast %14 : vector<8x1xf32> to vector<8x128xf32>
    %c0_12 = arith.constant 0 : index
    %c0_13 = arith.constant 0 : index
    %16 = vector.load %arg6[%c0_12, %c0_13] : memref<32x8xf32, #tpu.memory_space<vmem>>, vector<32x8xf32>
    %cst_14 = arith.constant dense<0.000000e+00> : vector<32x128xf32>
    %17 = tpu.matmul %16, %15, %cst_14 {dimension_numbers = #tpu.dot_dimension_numbers<[1], [0], [0], [1], [0, 0, 1, 1], [], []>} : vector<32x8xf32>, vector<8x128xf32>, vector<32x128xf32> -> vector<32x128xf32>
    %cst_15 = arith.constant 0.000000e+00 : f32
    %18 = vector.broadcast %cst_15 : f32 to vector<32x128xf32>
    %19 = arith.maximumf %17, %18 : vector<32x128xf32>
    %c0_16 = arith.constant 0 : index
    %c0_17 = arith.constant 0 : index
    %20 = vector.load %arg7[%c0_16, %c0_17] : memref<8x32xf32, #tpu.memory_space<vmem>>, vector<8x32xf32>
    %cst_18 = arith.constant dense<0.000000e+00> : vector<8x128xf32>
    %21 = tpu.matmul %20, %19, %cst_18 {dimension_numbers = #tpu.dot_dimension_numbers<[1], [0], [0], [1], [0, 0, 1, 1], [], []>} : vector<8x32xf32>, vector<32x128xf32>, vector<8x128xf32> -> vector<8x128xf32>
    %cst_19 = arith.constant 0.000000e+00 : f32
    %22 = vector.broadcast %cst_19 : f32 to vector<8x128xf32>
    %23 = arith.maximumf %21, %22 : vector<8x128xf32>
    %24 = vector.extract_strided_slice %23 {offsets = [0, 0], sizes = [8, 1], strides = [1, 1]} : vector<8x128xf32> to vector<8x1xf32>
    %25 = vector.broadcast %24 : vector<8x1xf32> to vector<8x256xf32>
    %26 = arith.mulf %9, %25 : vector<8x256xf32>
    %c0_20 = arith.constant 0 : index
    %c0_21 = arith.constant 0 : index
    %27 = vector.load %arg8[%c0_20, %c0_21] : memref<8x256xf32, #tpu.memory_space<vmem>>, vector<8x256xf32>
    tpu.vector_store %arg8[%c0_20, %c0_21], %26 {strides = array<i32>} : memref<8x256xf32, #tpu.memory_space<vmem>>, vector<8x256xf32>,
    return
  }
  func.func @transform_0(%arg0: i32) -> (i32, i32) {
    %c0_i32 = arith.constant 0 : i32
    %c0_i32_0 = arith.constant 0 : i32
    return %arg0, %c0_i32 : i32, i32
  }
  func.func @transform_1(%arg0: i32) -> (i32, i32) {
    %c0_i32 = arith.constant 0 : i32
    %c0_i32_0 = arith.constant 0 : i32
    return %arg0, %c0_i32 : i32, i32
  }
  func.func @transform_2(%arg0: i32) -> (i32, i32) {
    %c0_i32 = arith.constant 0 : i32
    %c0_i32_0 = arith.constant 0 : i32
    %c0_i32_1 = arith.constant 0 : i32
    return %c0_i32, %c0_i32_0 : i32, i32
  }
  func.func @transform_3(%arg0: i32) -> (i32, i32) {
    %c0_i32 = arith.constant 0 : i32
    %c0_i32_0 = arith.constant 0 : i32
    %c0_i32_1 = arith.constant 0 : i32
    return %c0_i32, %c0_i32_0 : i32, i32
  }
  func.func @transform_4(%arg0: i32) -> (i32, i32) {
    %c0_i32 = arith.constant 0 : i32
    %c0_i32_0 = arith.constant 0 : i32
    %c0_i32_1 = arith.constant 0 : i32
    return %c0_i32, %c0_i32_0 : i32, i32
  }
  func.func @transform_5(%arg0: i32) -> (i32, i32) {
    %c0_i32 = arith.constant 0 : i32
    %c0_i32_0 = arith.constant 0 : i32
    %c0_i32_1 = arith.constant 0 : i32
    return %c0_i32, %c0_i32_0 : i32, i32
  }
  func.func @transform_6(%arg0: i32) -> (i32, i32) {
    %c0_i32 = arith.constant 0 : i32
    %c0_i32_0 = arith.constant 0 : i32
    %c0_i32_1 = arith.constant 0 : i32
    return %c0_i32, %c0_i32_0 : i32, i32
  }
  func.func @transform_7(%arg0: i32) -> (i32, i32) {
    %c0_i32 = arith.constant 0 : i32
    %c0_i32_0 = arith.constant 0 : i32
    return %arg0, %c0_i32 : i32, i32
  }
}

</mosaic_0001>

<llo_original>
// kernel: tpu_custom_call.1
$region0: #{tpu_custom_call.1}
  #allocation0 [shape = 'u32[]', space=smem, size = 0x4, offset = 0x4, fixed_abs, tag = 'smem constant byte address 0x4 - core index']
  #allocation1 [shape = 'u32[72,128]{1,0:T(1,128)}', space=vmem, size = 0x9000, scoped, tag = 'internal scratch']
  %s0 = inlined_call_operand.vmem [shape: f32[16,256], index: 0, kind: input, shape index: {}]
  %s1 = inlined_call_operand.hbm [shape: f32[16,256], index: 1, kind: input, shape index: {}]
  %s2 = inlined_call_operand.vmem [shape: f32[8,8], index: 2, kind: input, shape index: {}]
  %s3 = inlined_call_operand.hbm [shape: f32[8,8], index: 3, kind: input, shape index: {}]
  %s4 = inlined_call_operand.vmem [shape: f32[8,1], index: 4, kind: input, shape index: {}]
  %s5 = inlined_call_operand.vmem [shape: f32[32,8], index: 5, kind: input, shape index: {}]
  %s6 = inlined_call_operand.hbm [shape: f32[8,32], index: 6, kind: input, shape index: {}]
  %s7 = inlined_call_operand.hbm [shape: f32[16,256], index: 7, kind: output, shape index: {}]
  %s8 = sld [smem:[#allocation0]]
  $region73: #{tpu_custom_call.1} parent=0
    _
  %s10 = ssub.s32 1, %s8
  %s11 = scalar_select 0, %s10, %s8
  $region1: #{tpu_custom_call.1} parent=0
    #allocation2 [shape = 'u8[16384]{0}', space=vmem, size = 0x4000, scoped, tag = 'input window, operand 1']
    #allocation3 [shape = 's32[2]{0}', space=sflag, size = 0x8, scoped, tag = 'scoped memory for tpu_custom_call.1']
    #allocation4 [shape = 's32[2]{0}', space=sflag, size = 0x8, scoped, tag = 'scoped memory for tpu_custom_call.1']
    #allocation5 [shape = 'u8[4096]{0}', space=vmem, size = 0x1000, scoped, tag = 'input window, operand 3, single buffered']
    #allocation6 [shape = 's32[1]{0}', space=sflag, size = 0x4, scoped, tag = 'scoped memory for tpu_custom_call.1']
    #allocation7 [shape = 'u8[4096]{0}', space=vmem, size = 0x1000, scoped, tag = 'input window, operand 6, single buffered']
    #allocation8 [shape = 'u8[16384]{0}', space=vmem, size = 0x4000, scoped, tag = 'output window, operand 0']
    %12 = vsyncpa [#allocation3], 0
    %s13 = scalar_lea.sflag [#allocation3], 1
    %14 = vsyncpa %s13, 0
    %15 = vsyncpa [#allocation6], 0
    %16 = vsyncpa [#allocation4], 0
    %s17 = scalar_lea.sflag [#allocation4], 1
    %18 = vsyncpa %s17, 0
    loop: start=0, step=1, limit=4
    $region2: #{tpu_custom_call.1} parent=1 // loop_pre_header
      _
    $region3: #{tpu_custom_call.1} parent=1 // loop_header
      %s20 = sphi 0, %s24
      %p21 = scmp.ge.s32.totalorder %s20, 4
      %s30 = sphi 0, %s32
      %s33 = sphi 0, %s30
      %s34 = sphi 0, %s33
      %s50 = sphi 0, %s34
      %s56 = sphi 0, %s58
      %s59 = sphi 0, %s56
      %s60 = sphi 0, %s59
      %s76 = sphi 0, %s60
      %s80 = sphi 0, %s80
      %s82 = sphi 0, %s80
      %s83 = sphi 0, %s82
      %s97 = sphi 0, %s83
      %s101 = sphi 0, %s101
      %s103 = sphi 0, %s101
      %s104 = sphi 0, %s103
      %s118 = sphi 0, %s104
      %s122 = sphi 0, %s122
      %s124 = sphi 0, %s122
      %s125 = sphi 0, %s124
      %s139 = sphi 0, %s125
      %s143 = sphi 0, %s143
      %s145 = sphi 0, %s143
      %s146 = sphi 0, %s145
      %s160 = sphi 0, %s146
      %s164 = sphi 0, %s164
      %s166 = sphi 0, %s164
      %s167 = sphi 0, %s166
      %s181 = sphi 0, %s167
      %s187 = sphi 0, %s189
      %s190 = sphi 0, %s187
      %s191 = sphi 0, %s190
      %s207 = sphi 0, %s191
    $region4: #{tpu_custom_call.1} parent=1 // loop_header_branch
      %23 = sbr.rel (%p21) target = $region8
    $region5: #{tpu_custom_call.1} parent=1 // loop_body
      %s25 = ssub.s32 %s20, 1
      %s26 = ssub.s32 %s20, 2
      %s27 = sadd.s32 %s20, 1
      %s28 = ssub.s32 %s20, %s27
      %p29 = scmp.eq.s32.totalorder %s28, 0
      %s31 = sadd.s32 %s30, 1
      %s32 = scalar_select %p29, %s30, %s31
      %p35 = pneg %p29
      %p36 = scmp.eq.s32.totalorder %s20, 1
      %p37 = por %p35, %p36
      %p38 = scmp.ne.s32.totalorder %s30, %s33
      %p39 = scmp.eq.s32.totalorder %s20, 0
      %p40 = por %p38, %p39
      %p41 = scmp.ne.s32.totalorder %s30, %s33
      %p42 = scmp.eq.s32.totalorder %s25, 1
      %p43 = por %p41, %p42
      %p44 = scmp.ne.s32.totalorder %s33, %s34
      %p45 = scmp.eq.s32.totalorder %s25, 0
      %p46 = por %p44, %p45
      %p47 = scmp.ne.s32.totalorder %s33, %s34
      %p48 = scmp.eq.s32.totalorder %s26, 1
      %p49 = por %p47, %p48
      %p51 = scmp.ne.s32.totalorder %s34, %s50
      %p52 = scmp.eq.s32.totalorder %s26, 0
      %p53 = por %p51, %p52
      %s54 = ssub.s32 %s20, %s27
      %p55 = scmp.eq.s32.totalorder %s54, 0
      %s57 = sadd.s32 %s56, 1
      %s58 = scalar_select %p55, %s56, %s57
      %p61 = pneg %p55
      %p62 = scmp.eq.s32.totalorder %s20, 1
      %p63 = por %p61, %p62
      %p64 = scmp.ne.s32.totalorder %s56, %s59
      %p65 = scmp.eq.s32.totalorder %s20, 0
      %p66 = por %p64, %p65
      %p67 = scmp.ne.s32.totalorder %s56, %s59
      %p68 = scmp.eq.s32.totalorder %s25, 1
      %p69 = por %p67, %p68
      %p70 = scmp.ne.s32.totalorder %s59, %s60
      %p71 = scmp.eq.s32.totalorder %s25, 0
      %p72 = por %p70, %p71
      %p73 = scmp.ne.s32.totalorder %s59, %s60
      %p74 = scmp.eq.s32.totalorder %s26, 1
      %p75 = por %p73, %p74
      %p77 = scmp.ne.s32.totalorder %s60, %s76
      %p78 = scmp.eq.s32.totalorder %s26, 0
      %p79 = por %p77, %p78
      %s81 = sadd.s32 %s80, 1
      %p84 = scmp.eq.s32.totalorder %s20, 1
      %p85 = scmp.ne.s32.totalorder %s80, %s82
      %p86 = scmp.eq.s32.totalorder %s20, 0
      %p87 = por %p85, %p86
      %p88 = scmp.ne.s32.totalorder %s80, %s82
      %p89 = scmp.eq.s32.totalorder %s25, 1
      %p90 = por %p88, %p89
      %p91 = scmp.ne.s32.totalorder %s82, %s83
      %p92 = scmp.eq.s32.totalorder %s25, 0
      %p93 = por %p91, %p92
      %p94 = scmp.ne.s32.totalorder %s82, %s83
      %p95 = scmp.eq.s32.totalorder %s26, 1
      %p96 = por %p94, %p95
      %p98 = scmp.ne.s32.totalorder %s83, %s97
      %p99 = scmp.eq.s32.totalorder %s26, 0
      %p100 = por %p98, %p99
      %s102 = sadd.s32 %s101, 1
      %p105 = scmp.eq.s32.totalorder %s20, 1
      %p106 = scmp.ne.s32.totalorder %s101, %s103
      %p107 = scmp.eq.s32.totalorder %s20, 0
      %p108 = por %p106, %p107
      %p109 = scmp.ne.s32.totalorder %s101, %s103
      %p110 = scmp.eq.s32.totalorder %s25, 1
      %p111 = por %p109, %p110
      %p112 = scmp.ne.s32.totalorder %s103, %s104
      %p113 = scmp.eq.s32.totalorder %s25, 0
      %p114 = por %p112, %p113
      %p115 = scmp.ne.s32.totalorder %s103, %s104
      %p116 = scmp.eq.s32.totalorder %s26, 1
      %p117 = por %p115, %p116
      %p119 = scmp.ne.s32.totalorder %s104, %s118
      %p120 = scmp.eq.s32.totalorder %s26, 0
      %p121 = por %p119, %p120
      %s123 = sadd.s32 %s122, 1
      %p126 = scmp.eq.s32.totalorder %s20, 1
      %p127 = scmp.ne.s32.totalorder %s122, %s124
      %p128 = scmp.eq.s32.totalorder %s20, 0
      %p129 = por %p127, %p128
      %p130 = scmp.ne.s32.totalorder %s122, %s124
      %p131 = scmp.eq.s32.totalorder %s25, 1
      %p132 = por %p130, %p131
      %p133 = scmp.ne.s32.totalorder %s124, %s125
      %p134 = scmp.eq.s32.totalorder %s25, 0
      %p135 = por %p133, %p134
      %p136 = scmp.ne.s32.totalorder %s124, %s125
      %p137 = scmp.eq.s32.totalorder %s26, 1
      %p138 = por %p136, %p137
      %p140 = scmp.ne.s32.totalorder %s125, %s139
      %p141 = scmp.eq.s32.totalorder %s26, 0
      %p142 = por %p140, %p141
      %s144 = sadd.s32 %s143, 1
      %p147 = scmp.eq.s32.totalorder %s20, 1
      %p148 = scmp.ne.s32.totalorder %s143, %s145
      %p149 = scmp.eq.s32.totalorder %s20, 0
      %p150 = por %p148, %p149
      %p151 = scmp.ne.s32.totalorder %s143, %s145
      %p152 = scmp.eq.s32.totalorder %s25, 1
      %p153 = por %p151, %p152
      %p154 = scmp.ne.s32.totalorder %s145, %s146
      %p155 = scmp.eq.s32.totalorder %s25, 0
      %p156 = por %p154, %p155
      %p157 = scmp.ne.s32.totalorder %s145, %s146
      %p158 = scmp.eq.s32.totalorder %s26, 1
      %p159 = por %p157, %p158
      %p161 = scmp.ne.s32.totalorder %s146, %s160
      %p162 = scmp.eq.s32.totalorder %s26, 0
      %p163 = por %p161, %p162
      %s165 = sadd.s32 %s164, 1
      %p168 = scmp.eq.s32.totalorder %s20, 1
      %p169 = scmp.ne.s32.totalorder %s164, %s166
      %p170 = scmp.eq.s32.totalorder %s20, 0
      %p171 = por %p169, %p170
      %p172 = scmp.ne.s32.totalorder %s164, %s166
      %p173 = scmp.eq.s32.totalorder %s25, 1
      %p174 = por %p172, %p173
      %p175 = scmp.ne.s32.totalorder %s166, %s167
      %p176 = scmp.eq.s32.totalorder %s25, 0
      %p177 = por %p175, %p176
      %p178 = scmp.ne.s32.totalorder %s166, %s167
      %p179 = scmp.eq.s32.totalorder %s26, 1
      %p180 = por %p178, %p179
      %p182 = scmp.ne.s32.totalorder %s167, %s181
      %p183 = scmp.eq.s32.totalorder %s26, 0
      %p184 = por %p182, %p183
      %s185 = ssub.s32 %s20, %s27
      %p186 = scmp.eq.s32.totalorder %s185, 0
      %s188 = sadd.s32 %s187, 1
      %s189 = scalar_select %p186, %s187, %s188
      %p192 = pneg %p186
      %p193 = scmp.eq.s32.totalorder %s20, 1
      %p194 = por %p192, %p193
      %p195 = scmp.ne.s32.totalorder %s187, %s190
      %p196 = scmp.eq.s32.totalorder %s20, 0
      %p197 = por %p195, %p196
      %p198 = scmp.ne.s32.totalorder %s187, %s190
      %p199 = scmp.eq.s32.totalorder %s25, 1
      %p200 = por %p198, %p199
      %p201 = scmp.ne.s32.totalorder %s190, %s191
      %p202 = scmp.eq.s32.totalorder %s25, 0
      %p203 = por %p201, %p202
      %p204 = scmp.ne.s32.totalorder %s190, %s191
      %p205 = scmp.eq.s32.totalorder %s26, 1
      %p206 = por %p204, %p205
      %p208 = scmp.ne.s32.totalorder %s191, %s207
      %p209 = scmp.eq.s32.totalorder %s26, 0
      %p210 = por %p208, %p209
      %p211 = scmp.le.s32.totalorder 1, %s20
      %p212 = scmp.lt.s32.totalorder %s20, 3
      %p213 = pnand %p211, %p212
      %p214 = pneg %p213
      // Predicated region
      $region9: #{tpu_custom_call.1} parent=5 // pred_check
        _
      $region10: #{tpu_custom_call.1} parent=5 // pred_check_branch
        %216 = sbr.rel (%p213) target = $region12
      $region11: #{tpu_custom_call.1} parent=5 // pred_region
        %s217 = ssub.s32 %s20, 1
        // Predicated region
        $region13: #{tpu_custom_call.1} parent=11 // pred_check
          %p218 = pneg %p93
        $region14: #{tpu_custom_call.1} parent=11 // pred_check_branch
          %220 = sbr.rel (%p218) target = $region16
        $region15: #{tpu_custom_call.1} parent=11 // pred_region
          _
        $region16: #{tpu_custom_call.1} parent=11 // pred_fallthru
          _
        // Predicated region
        $region17: #{tpu_custom_call.1} parent=11 // pred_check
          %p221 = pneg %p114
        $region18: #{tpu_custom_call.1} parent=11 // pred_check_branch
          %223 = sbr.rel (%p221) target = $region20
        $region19: #{tpu_custom_call.1} parent=11 // pred_region
          %225 = vsyncadd [#allocation6], 0
          %s227 = sshll.u32 %s3, 4
          %s228 = int_to_ptr.hbm [resolvable:$true] %s227
          %s229 = sshll.u32 [#allocation5], 4
          %s230 = int_to_ptr.vmem [resolvable:$true] %s229
          %232 = dma.hbm_to_vmem [thread:$0]  %s228, 128, %s230, [#allocation6]
        $region20: #{tpu_custom_call.1} parent=11 // pred_fallthru
          _
        // Predicated region
        $region21: #{tpu_custom_call.1} parent=11 // pred_check
          %p233 = pneg %p135
        $region22: #{tpu_custom_call.1} parent=11 // pred_check_branch
          %235 = sbr.rel (%p233) target = $region24
        $region23: #{tpu_custom_call.1} parent=11 // pred_region
          _
        $region24: #{tpu_custom_call.1} parent=11 // pred_fallthru
          _
        // Predicated region
        $region25: #{tpu_custom_call.1} parent=11 // pred_check
          %p236 = pneg %p156
        $region26: #{tpu_custom_call.1} parent=11 // pred_check_branch
          %238 = sbr.rel (%p236) target = $region28
        $region27: #{tpu_custom_call.1} parent=11 // pred_region
          _
        $region28: #{tpu_custom_call.1} parent=11 // pred_fallthru
          _
        // Predicated region
        $region29: #{tpu_custom_call.1} parent=11 // pred_check
          %p239 = pneg %p177
        $region30: #{tpu_custom_call.1} parent=11 // pred_check_branch
          %241 = sbr.rel (%p239) target = $region32
        $region31: #{tpu_custom_call.1} parent=11 // pred_region
          %243 = vsyncadd [#allocation6], 0
          %s245 = sshll.u32 %s6, 4
          %s246 = int_to_ptr.hbm [resolvable:$true] %s245
          %s247 = sshll.u32 [#allocation7], 4
          %s248 = int_to_ptr.vmem [resolvable:$true] %s247
          %250 = dma.hbm_to_vmem [thread:$0]  %s246, 128, %s248, [#allocation6]
        $region32: #{tpu_custom_call.1} parent=11 // pred_fallthru
          _
      $region12: #{tpu_custom_call.1} parent=5 // pred_fallthru
        _
      %p251 = scmp.lt.s32.totalorder %s20, 2
      // Predicated region
      $region33: #{tpu_custom_call.1} parent=5 // pred_check
        %p252 = pneg %p251
      $region34: #{tpu_custom_call.1} parent=5 // pred_check_branch
        %254 = sbr.rel (%p252) target = $region36
      $region35: #{tpu_custom_call.1} parent=5 // pred_region
        // Predicated region
        $region37: #{tpu_custom_call.1} parent=35 // pred_check
          %p255 = pneg %p40
        $region38: #{tpu_custom_call.1} parent=35 // pred_check_branch
          %257 = sbr.rel (%p255) target = $region40
        $region39: #{tpu_custom_call.1} parent=35 // pred_region
          %p258 = scmp.lt.s32.totalorder %s20, 1
          %s259 = scalar_select %p258, %s20, 1
          %s260 = smul.addr %s259, 2
          %s261 = smul.addr %s260, 8
          %s262 = scalar_lea.vmem %s0, %s261
        $region40: #{tpu_custom_call.1} parent=35 // pred_fallthru
          _
        // Predicated region
        $region41: #{tpu_custom_call.1} parent=35 // pred_check
          %p263 = pneg %p66
        $region42: #{tpu_custom_call.1} parent=35 // pred_check_branch
          %265 = sbr.rel (%p263) target = $region44
        $region43: #{tpu_custom_call.1} parent=35 // pred_region
          %s266 = sand.u32 %s56, 1
          %s267 = scalar_lea.sflag [#allocation3], %s266
          %s268 = sand.u32 %s56, 1
          %s269 = smul.addr %s268, 16
          %s270 = scalar_lea.vmem [#allocation2], %s269
          %272 = vsyncadd %s267, 0
          %s273 = smul.addr %s20, 2
          %s274 = smul.addr %s273, 8
          %s275 = scalar_lea.hbm %s1, %s274
          %s277 = sshll.u32 %s275, 4
          %s278 = int_to_ptr.hbm [resolvable:$true] %s277
          %s279 = sshll.u32 %s270, 4
          %s280 = int_to_ptr.vmem [resolvable:$true] %s279
          %282 = dma.hbm_to_vmem [thread:$0]  %s278, 256, %s280, %s267
        $region44: #{tpu_custom_call.1} parent=35 // pred_fallthru
          _
      $region36: #{tpu_custom_call.1} parent=5 // pred_fallthru
        _
      %p283 = scmp.le.s32.totalorder 1, %s20
      %p284 = scmp.lt.s32.totalorder %s20, 3
      %p285 = pnand %p283, %p284
      %p286 = pneg %p285
      // Predicated region
      $region45: #{tpu_custom_call.1} parent=5 // pred_check
        _
      $region46: #{tpu_custom_call.1} parent=5 // pred_check_branch
        %288 = sbr.rel (%p285) target = $region48
      $region47: #{tpu_custom_call.1} parent=5 // pred_region
        %s289 = ssub.s32 %s20, 1
        %s290 = sand.u32 %s59, 1
        %s291 = scalar_lea.sflag [#allocation3], %s290
        %s292 = sand.u32 %s59, 1
        %s293 = smul.addr %s292, 16
        %s294 = scalar_lea.vmem [#allocation2], %s293
        // Predicated region
        $region49: #{tpu_custom_call.1} parent=47 // pred_check
          %p295 = pneg %p72
        $region50: #{tpu_custom_call.1} parent=47 // pred_check_branch
          %297 = sbr.rel (%p295) target = $region52
        $region51: #{tpu_custom_call.1} parent=47 // pred_region
          %299 = dma.done %s291, 256
        $region52: #{tpu_custom_call.1} parent=47 // pred_fallthru
          _
        // Predicated region
        $region53: #{tpu_custom_call.1} parent=47 // pred_check
          %p300 = pneg %p114
        $region54: #{tpu_custom_call.1} parent=47 // pred_check_branch
          %302 = sbr.rel (%p300) target = $region56
        $region55: #{tpu_custom_call.1} parent=47 // pred_region
          %304 = dma.done [#allocation6], 128
        $region56: #{tpu_custom_call.1} parent=47 // pred_fallthru
          _
        // Predicated region
        $region57: #{tpu_custom_call.1} parent=47 // pred_check
          %p305 = pneg %p177
        $region58: #{tpu_custom_call.1} parent=47 // pred_check_branch
          %307 = sbr.rel (%p305) target = $region60
        $region59: #{tpu_custom_call.1} parent=47 // pred_region
          %309 = dma.done [#allocation6], 128
        $region60: #{tpu_custom_call.1} parent=47 // pred_fallthru
          _
        %p310 = scmp.lt.s32.totalorder %s25, 1
        %s311 = scalar_select %p310, %s25, 1
        %s312 = smul.addr %s311, 2
        %s313 = smul.addr %s312, 8
        %s314 = scalar_lea.vmem %s0, %s313
        %p315 = pneg %p46
        %p316 = pneg %p43
        %s317 = sand.u32 %s59, 1
        %s318 = scalar_lea.sflag [#allocation3], %s317
        %s319 = sand.u32 %s59, 1
        %s320 = smul.addr %s319, 16
        %s321 = scalar_lea.vmem [#allocation2], %s320
        %p322 = pneg %p72
        %p323 = pneg %p69
        %p324 = pneg %p93
        %p325 = pneg %p90
        %p326 = pneg %p114
        %p327 = pneg %p111
        %p328 = pneg %p135
        %p329 = pneg %p132
        %p330 = pneg %p156
        %p331 = pneg %p153
        %p332 = pneg %p177
        %p333 = pneg %p174
        %p334 = pneg %p203
        %p335 = pneg %p200
        %s336 = sand.u32 %s190, 1
        %s337 = scalar_lea.sflag [#allocation4], %s336
        %s338 = sand.u32 %s190, 1
        %s339 = smul.addr %s338, 16
        %s340 = scalar_lea.vmem [#allocation8], %s339
        %p341 = scmp.lt.s32.totalorder %s25, 1
        %s342 = scalar_select %p341, %s25, 1
        %s343 = smul.addr %s342, 2
        %s344 = smul.addr %s343, 8
        %s345 = scalar_lea.vmem %s0, %s344
        %v346 = vld [vmem:[%s345] sm:$0xff]
        %v347 = vld [vmem:[%s345 + $0x8] sm:$0xff]
        %v348 = vld [vmem:[%s294] sm:$0xff]
        %v349 = vld [vmem:[%s294 + $0x8] sm:$0xff]
        %v350 = vld [vmem:[%s2] sm:$0xff]
        %v351 = vld [vmem:[#allocation5] sm:$0xff]
        %vm352 = vcmask 64512
        %v354 = vsel %vm352, %v351, 0
        %356 = vmatpush.msra.mxu0 0.0
        %357 = vmatpush.msra.mxu0 0.0
        %358 = vmatpush.msra.mxu0 0.0
        %359 = vmatpush.msra.mxu0 0.0
        %360 = vmatpush.msra.mxu0 0.0
        %361 = vmatpush.msra.mxu0 0.0
        %362 = vmatpush.msra.mxu0 0.0
        %363 = vmatpush.msra.mxu0 0.0
        %364 = vmatpush.msra.mxu0 0.0
        %365 = vmatpush.msra.mxu0 0.0
        %366 = vmatpush.msra.mxu0 0.0
        %367 = vmatpush.msra.mxu0 0.0
        %368 = vmatpush.msra.mxu0 0.0
        %369 = vmatpush.msra.mxu0 0.0
        %370 = vmatpush.msra.mxu0 0.0
        %371 = vmatpush.msra.mxu0 %v348
        %372 = vmatmul.f32.gmra.mxu0 %v354
        %v373 = vpop.f32.mrf.mxu0
        %v374 = vadd.f32 0.0, %v373
        %375 = vdwg.mxu0
        %376 = vmatpush.msra.mxu0 0.0
        %377 = vmatpush.msra.mxu0 0.0
        %378 = vmatpush.msra.mxu0 0.0
        %379 = vmatpush.msra.mxu0 0.0
        %380 = vmatpush.msra.mxu0 0.0
        %381 = vmatpush.msra.mxu0 0.0
        %382 = vmatpush.msra.mxu0 0.0
        %383 = vmatpush.msra.mxu0 0.0
        %384 = vmatpush.msra.mxu0 0.0
        %385 = vmatpush.msra.mxu0 0.0
        %386 = vmatpush.msra.mxu0 0.0
        %387 = vmatpush.msra.mxu0 0.0
        %388 = vmatpush.msra.mxu0 0.0
        %389 = vmatpush.msra.mxu0 0.0
        %390 = vmatpush.msra.mxu0 0.0
        %391 = vmatpush.msra.mxu0 %v349
        %392 = vmatmul.f32.gmra.mxu0 %v354
        %v393 = vpop.f32.mrf.mxu0
        %v394 = vadd.f32 0.0, %v393
        %395 = vdwg.mxu0
        %v397 = vsel %vm352, %v350, 0
        %399 = vmatpush.msra.mxu0 0.0
        %400 = vmatpush.msra.mxu0 0.0
        %401 = vmatpush.msra.mxu0 0.0
        %402 = vmatpush.msra.mxu0 0.0
        %403 = vmatpush.msra.mxu0 0.0
        %404 = vmatpush.msra.mxu0 0.0
        %405 = vmatpush.msra.mxu0 0.0
        %406 = vmatpush.msra.mxu0 0.0
        %407 = vmatpush.msra.mxu0 0.0
        %408 = vmatpush.msra.mxu0 0.0
        %409 = vmatpush.msra.mxu0 0.0
        %410 = vmatpush.msra.mxu0 0.0
        %411 = vmatpush.msra.mxu0 0.0
        %412 = vmatpush.msra.mxu0 0.0
        %413 = vmatpush.msra.mxu0 0.0
        %414 = vmatpush.msra.mxu0 %v346
        %415 = vmatmul.f32.gmra.mxu0 %v397
        %v416 = vpop.f32.mrf.mxu0
        %v417 = vadd.f32 %v374, %v416
        %418 = vdwg.mxu0
        %419 = vmatpush.msra.mxu0 0.0
        %420 = vmatpush.msra.mxu0 0.0
        %421 = vmatpush.msra.mxu0 0.0
        %422 = vmatpush.msra.mxu0 0.0
        %423 = vmatpush.msra.mxu0 0.0
        %424 = vmatpush.msra.mxu0 0.0
        %425 = vmatpush.msra.mxu0 0.0
        %426 = vmatpush.msra.mxu0 0.0
        %427 = vmatpush.msra.mxu0 0.0
        %428 = vmatpush.msra.mxu0 0.0
        %429 = vmatpush.msra.mxu0 0.0
        %430 = vmatpush.msra.mxu0 0.0
        %431 = vmatpush.msra.mxu0 0.0
        %432 = vmatpush.msra.mxu0 0.0
        %433 = vmatpush.msra.mxu0 0.0
        %434 = vmatpush.msra.mxu0 %v347
        %435 = vmatmul.f32.gmra.mxu0 %v397
        %v436 = vpop.f32.mrf.mxu0
        %v437 = vadd.f32 %v394, %v436
        %438 = vdwg.mxu0
        %v439 = vld [vmem:[%s4] sm:$0xff]
        %441 = vset.pattern.permute.xlu0 0
        %442 = vperm.xlu0 %441, %v439
        %v443 = vpop.permute.xlu0 %442
        %v445 = vadd.f32 %v417, %v443
        %v446 = vadd.f32 %v437, %v443
        %v447 = vadd.f32 %v445, %v446
        %448 = vadd.xlane.f32.xlu0 %v447
        %v449 = vpop.xlane.xlu0 %448
        %v450 = vmul.f32 %v449, 0.00390625
        %v451 = vld [vmem:[%s5] sm:$0xff]
        %v452 = vld [vmem:[%s5 + $0x8] sm:$0xff]
        %v453 = vld [vmem:[%s5 + $0x10] sm:$0xff]
        %v454 = vld [vmem:[%s5 + $0x18] sm:$0xff]
        %v456 = vsel %vm352, %v451, 0
        %v459 = vsel %vm352, %v452, 0
        %v462 = vsel %vm352, %v453, 0
        %v465 = vsel %vm352, %v454, 0
        %467 = vmatpush.msra.mxu0 0.0
        %468 = vmatpush.msra.mxu0 0.0
        %469 = vmatpush.msra.mxu0 0.0
        %470 = vmatpush.msra.mxu0 0.0
        %471 = vmatpush.msra.mxu0 0.0
        %472 = vmatpush.msra.mxu0 0.0
        %473 = vmatpush.msra.mxu0 0.0
        %474 = vmatpush.msra.mxu0 0.0
        %475 = vmatpush.msra.mxu0 0.0
        %476 = vmatpush.msra.mxu0 0.0
        %477 = vmatpush.msra.mxu0 0.0
        %478 = vmatpush.msra.mxu0 0.0
        %479 = vmatpush.msra.mxu0 0.0
        %480 = vmatpush.msra.mxu0 0.0
        %481 = vmatpush.msra.mxu0 0.0
        %482 = vmatpush.msra.mxu0 %v450
        %483 = vmatmul.f32.gmra.mxu0 %v456
        %v484 = vpop.f32.mrf.mxu0
        %v485 = vadd.f32 0.0, %v484
        %486 = vmatmul.f32.gmra.mxu0 %v459
        %v487 = vpop.f32.mrf.mxu0
        %v488 = vadd.f32 0.0, %v487
        %489 = vmatmul.f32.gmra.mxu0 %v462
        %v490 = vpop.f32.mrf.mxu0
        %v491 = vadd.f32 0.0, %v490
        %492 = vmatmul.f32.gmra.mxu0 %v465
        %v493 = vpop.f32.mrf.mxu0
        %v494 = vadd.f32 0.0, %v493
        %495 = vdwg.mxu0
        %v496 = vmax.f32 %v485, 0.0
        %v497 = vmax.f32 %v488, 0.0
        %v498 = vmax.f32 %v491, 0.0
        %v499 = vmax.f32 %v494, 0.0
        %v500 = vld [vmem:[#allocation7] sm:$0xff]
        %vm501 = vcmask 261120
        %v503 = vsel %vm501, %v500, 0
        %505 = vmatpush.msra.mxu0 0.0
        %506 = vmatpush.msra.mxu0 0.0
        %507 = vmatpush.msra.mxu0 0.0
        %508 = vmatpush.msra.mxu0 0.0
        %509 = vmatpush.msra.mxu0 0.0
        %510 = vmatpush.msra.mxu0 0.0
        %511 = vmatpush.msra.mxu0 0.0
        %512 = vmatpush.msra.mxu0 0.0
        %513 = vmatpush.msra.mxu0 0.0
        %514 = vmatpush.msra.mxu0 0.0
        %515 = vmatpush.msra.mxu0 0.0
        %516 = vmatpush.msra.mxu0 0.0
        %517 = vmatpush.msra.mxu0 %v499
        %518 = vmatpush.msra.mxu0 %v498
        %519 = vmatpush.msra.mxu0 %v497
        %520 = vmatpush.msra.mxu0 %v496
        %521 = vmatmul.f32.gmra.mxu0 %v503
        %v522 = vpop.f32.mrf.mxu0
        %v523 = vadd.f32 0.0, %v522
        %524 = vdwg.mxu0
        %v525 = vmax.f32 %v523, 0.0
        %527 = vset.pattern.permute.xlu0 0
        %528 = vperm.xlu0 %527, %v525
        %v529 = vpop.permute.xlu0 %528
        %v531 = vmul.f32 %v445, %v529
        %v532 = vmul.f32 %v446, %v529
        %533 = vst [vmem:[%s340] sm:$0xff] %v531
        %534 = vst [vmem:[%s340 + $0x8] sm:$0xff] %v532
        %s535 = sand.u32 %s190, 1
        %s536 = scalar_lea.sflag [#allocation4], %s535
        %s537 = sand.u32 %s190, 1
        %s538 = smul.addr %s537, 16
        %s539 = scalar_lea.vmem [#allocation8], %s538
        // Predicated region
        $region61: #{tpu_custom_call.1} parent=47 // pred_check
          %p540 = pneg %p200
        $region62: #{tpu_custom_call.1} parent=47 // pred_check_branch
          %542 = sbr.rel (%p540) target = $region64
        $region63: #{tpu_custom_call.1} parent=47 // pred_region
          %544 = vsyncadd %s536, 0
          %s545 = smul.addr %s25, 2
          %s546 = smul.addr %s545, 8
          %s547 = scalar_lea.hbm %s7, %s546
          %s549 = sshll.u32 %s539, 4
          %s550 = int_to_ptr.vmem [resolvable:$true] %s549
          %s551 = sshll.u32 %s547, 4
          %s552 = int_to_ptr.hbm [resolvable:$true] %s551
          %554 = dma.vmem_to_hbm [thread:$0]  %s550, 256, %s552, %s536
        $region64: #{tpu_custom_call.1} parent=47 // pred_fallthru
          _
      $region48: #{tpu_custom_call.1} parent=5 // pred_fallthru
        _
      %p555 = scmp.le.s32.totalorder 2, %s20
      // Predicated region
      $region65: #{tpu_custom_call.1} parent=5 // pred_check
        %p556 = pneg %p555
      $region66: #{tpu_custom_call.1} parent=5 // pred_check_branch
        %558 = sbr.rel (%p556) target = $region68
      $region67: #{tpu_custom_call.1} parent=5 // pred_region
        %s559 = ssub.s32 %s20, 2
        // Predicated region
        $region69: #{tpu_custom_call.1} parent=67 // pred_check
          %p560 = pneg %p206
        $region70: #{tpu_custom_call.1} parent=67 // pred_check_branch
          %562 = sbr.rel (%p560) target = $region72
        $region71: #{tpu_custom_call.1} parent=67 // pred_region
          %s563 = sand.u32 %s191, 1
          %s564 = scalar_lea.sflag [#allocation4], %s563
          %s565 = sand.u32 %s191, 1
          %s566 = smul.addr %s565, 16
          %s567 = scalar_lea.vmem [#allocation8], %s566
          %569 = dma.done %s564, 256
        $region72: #{tpu_custom_call.1} parent=67 // pred_fallthru
          _
      $region68: #{tpu_custom_call.1} parent=5 // pred_fallthru
        _
    $region6: #{tpu_custom_call.1} parent=1 // loop_footer
      %s24 = sadd.s32 1, %s20
    $region7: #{tpu_custom_call.1} parent=1 // loop_footer_branch
      %19 = sbr.rel target = $region3
    $region8: #{tpu_custom_call.1} parent=1 // loop_exit
      _
    %570 = vsyncpa [#allocation3], 1
    %s571 = scalar_lea.sflag [#allocation3], 1
    %572 = vsyncpa %s571, 1
    %573 = vsyncpa [#allocation6], 1
    %574 = vsyncpa [#allocation4], 1
    %s575 = scalar_lea.sflag [#allocation4], 1
    %576 = vsyncpa %s575, 1

</llo_original>
